<compile_context>
chip_gen: v5e
topology: v5e:2x2
jax: 0.10.0
libtpu: 0.0.40
codegen_flags: <defaults>
</compile_context>

<pallas_src>
import jax
import jax.numpy as jnp
from jax import lax
from jax.experimental import pallas as pl
from jax.experimental.pallas import tpu as pltpu


def _phase_weight(ws):
    """str_conv3x3 (stride 2, pad 1) OIHW weight -> equivalent 2x2-conv weight
    over the 4 space-to-depth phase channels.

    Returns (4, c_out, 4*c_in).  Tap index t = ty*2 + tx corresponds to the
    spatial offset (ty-1, tx-1) on the phase grid; the stacked input-channel
    index is (py*2 + px)*c_in + ci (phase-major)."""
    c_out, c_in = ws.shape[:2]
    zero = jnp.zeros((c_out, c_in), ws.dtype)
    taps = []
    for ty in range(2):
        for tx in range(2):
            blocks = []
            for py in range(2):
                for px in range(2):
                    dy = 2 * (ty - 1) + py + 1
                    dx = 2 * (tx - 1) + px + 1
                    if 0 <= dy <= 2 and 0 <= dx <= 2:
                        blocks.append(ws[:, :, dy, dx])
                    else:
                        blocks.append(zero)
            taps.append(jnp.concatenate(blocks, axis=1))    # (c_out, 4*c_in)
    return jnp.stack(taps)                                  # (4, c_out, 4*c_in)


def render_trans_forward(x_high, x_low, w3, w1, ws):
    """x_high: (b, c_high, H, W) NCHW;  x_low: (b, c_low, 2H, 2W) NCHW.

    w3: conv3x3 weight   (c_high, c_high, 3, 3)   (OIHW, no bias)
    w1: conv1x1 weight   (c_high, c_low, 1, 1)
    ws: str_conv3x3 wght (c_high, c_low, 3, 3), stride 2, pad 1
    Returns (b, c_high, H, W) NCHW.
    """
    b, c_high, H, W = x_high.shape
    _, c_low, h2, w2 = x_low.shape
    assert h2 == 2 * H and w2 == 2 * W, "x_low must be 2x the x_high resolution"

    N = H * W                      # flattened output spatial (lane dim)
    pad = W + 1                    # flat halo so every 3x3 tap is a lane offset
    L = N + 2 * pad                # padded flat length (same for both inputs)
    dtype = x_high.dtype

    # ---- x_high: NCHW -> (b, c_high, L) flat with (W+1) zero halo pads ----
    xh_flat = jnp.pad(x_high.reshape(b, c_high, N),
                      ((0, 0), (0, 0), (pad, pad)))

    # ---- x_low: space-to-depth into 4 phase channels, then flatten + pad ----
    # xph[(py*2+px)*c_low + ci, y, x] = x_low[ci, 2y+py, 2x+px]
    xl_ph = x_low.reshape(b, c_low, H, 2, W, 2)
    xl_ph = jnp.transpose(xl_ph, (0, 3, 5, 1, 2, 4))        # (b, py, px, ci, H, W)
    xl_ph = xl_ph.reshape(b, 4 * c_low, N)
    xl_flat = jnp.pad(xl_ph, ((0, 0), (0, 0), (pad, pad)))

    # ---- column masks that kill row wrap-around of the horizontal taps ----
    col = jnp.arange(N, dtype=jnp.int32) % W
    masks = jnp.stack([(col != 0), (col != W - 1)]).astype(dtype)     # (2, N)

    # ---- weights ----
    w3_t = jnp.transpose(w3, (2, 3, 0, 1)).reshape(9, c_high, c_high)  # tap-major
    wp = _phase_weight(ws)                                   # (4, c_high, 4*c_low)
    w1p = jnp.tile(w1[:, :, 0, 0], (1, 4))                   # (c_high, 4*c_low)

    inv_count = 1.0 / float(4 * N)                           # mean over 2H*2W

    def kernel(xh_ref, xl_ref, m_ref, w3_ref, wp_ref, w1p_ref, o_ref):
        mask_l = m_ref[0:1, :]          # zero where x == 0     (1, N)
        mask_r = m_ref[1:2, :]          # zero where x == W - 1 (1, N)

        # gp = relu(conv1x1(global_avg_pool(x_low))); pads are zero so a full
        # lane-sum of the (already loaded) phase block equals the spatial sum.
        pooled = jnp.sum(xl_ref[...], axis=1, keepdims=True) * inv_count
        gp = jnp.dot(w1p_ref[...], pooled, preferred_element_type=jnp.float32)
        gp = jnp.maximum(gp, 0.0)                            # (c_high, 1)

        # conv3x3(x_high): 9 lane-shifted matmuls accumulated in f32.
        msk = jnp.zeros((c_high, N), jnp.float32)
        for dy in range(3):
            for dx in range(3):
                sl = xh_ref[:, pl.ds(dy * W + dx, N)]        # (c_high, N)
                if dx == 0:
                    sl = sl * mask_l
                elif dx == 2:
                    sl = sl * mask_r
                msk = msk + jnp.dot(w3_ref[3 * dy + dx], sl,
                                    preferred_element_type=jnp.float32)

        # str_conv3x3(x_low, stride 2) == 2x2 conv over the 4 spatial phases.
        low = jnp.zeros((c_high, N), jnp.float32)
        for ty in range(2):
            for tx in range(2):
                sl = xl_ref[:, pl.ds(ty * W + tx, N)]        # (4*c_low, N)
                if tx == 0:
                    sl = sl * mask_l
                low = low + jnp.dot(wp_ref[2 * ty + tx], sl,
                                    preferred_element_type=jnp.float32)

        # out = relu(str_conv3x3(x_low) + conv3x3(x_high) * gp)
        o_ref[...] = jnp.maximum(low + msk * gp, 0.0).astype(o_ref.dtype)

    out_flat = pl.pallas_call(
        kernel,
        out_shape=jax.ShapeDtypeStruct((b, c_high, N), dtype),
        grid_spec=pltpu.PrefetchScalarGridSpec(
            num_scalar_prefetch=0,
            grid=(b,),
            in_specs=[
                # batch dim squeezed -> kernel refs are 2D (channels, lanes)
                pl.BlockSpec((None, c_high, L), lambda i: (i, 0, 0)),
                pl.BlockSpec((None, 4 * c_low, L), lambda i: (i, 0, 0)),
                # grid-invariant small tensors (pipeline dedupes re-fetches)
                pl.BlockSpec((2, N), lambda i: (0, 0)),
                pl.BlockSpec((9, c_high, c_high), lambda i: (0, 0, 0)),
                pl.BlockSpec((4, c_high, 4 * c_low), lambda i: (0, 0, 0)),
                pl.BlockSpec((c_high, 4 * c_low), lambda i: (0, 0)),
            ],
            out_specs=pl.BlockSpec((None, c_high, N), lambda i: (i, 0, 0)),
        ),
        compiler_params=pltpu.CompilerParams(
            dimension_semantics=("parallel",),
            vmem_limit_bytes=32 * 1024 * 1024,
        ),
    )(xh_flat, xl_flat, masks, w3_t, wp, w1p)

    # free reshape: the kernel output is already channel-major NCHW, flat HW.
    return out_flat.reshape(b, c_high, H, W)


def _ref_forward(x_high, x_low, w3, w1, ws):
    """Pure-JAX reference matching the PyTorch forward exactly (NCHW)."""
    dn = ('NCHW', 'OIHW', 'NCHW')
    gp = jnp.mean(x_low, axis=(2, 3), keepdims=True)
    gp = lax.conv_general_dilated(gp, w1, (1, 1), 'VALID', dimension_numbers=dn)
    gp = jnp.maximum(gp, 0.0)
    xh_mask = lax.conv_general_dilated(x_high, w3, (1, 1), ((1, 1), (1, 1)),
                                       dimension_numbers=dn)
    x_att = xh_mask * gp
    low = lax.conv_general_dilated(x_low, ws, (2, 2), ((1, 1), (1, 1)),
                                   dimension_numbers=dn)
    return jnp.maximum(low + x_att, 0.0)


if __name__ == "__main__":
    key = jax.random.PRNGKey(0)
    b, c_high, c_low = 2, 8, 4
    H = W = 8            # x_high spatial
    h = w = 2 * H        # x_low spatial (str_conv3x3 stride-2 brings it to H)

    k1, k2, k3, k4, k5 = jax.random.split(key, 5)
    x_high = jax.random.normal(k1, (b, c_high, H, W), jnp.float32)
    x_low = jax.random.normal(k2, (b, c_low, h, w), jnp.float32)
    # deterministic synthetic weights (shapes per RenderTrans.__init__, bias=False)
    w3 = 0.1 * jax.random.normal(k3, (c_high, c_high, 3, 3), jnp.float32)
    w1 = 0.1 * jax.random.normal(k4, (c_high, c_low, 1, 1), jnp.float32)
    ws = 0.1 * jax.random.normal(k5, (c_high, c_low, 3, 3), jnp.float32)

    out = jax.block_until_ready(render_trans_forward(x_high, x_low, w3, w1, ws))
    ref = _ref_forward(x_high, x_low, w3, w1, ws)
    assert out.shape == (b, c_high, H, W)
    assert jnp.allclose(out, ref, atol=1e-4, rtol=1e-4), "mismatch vs JAX reference"
    print("KERNEL_OK")
</pallas_src>

<mosaic_0001>
module attributes {stable_mosaic.version = 11 : i64} {
  func.func @kernel(%arg0: i32, %arg1: memref<1x8x82xf32, #tpu.memory_space<vmem>>, %arg2: memref<1x16x82xf32, #tpu.memory_space<vmem>>, %arg3: memref<2x64xf32, #tpu.memory_space<vmem>>, %arg4: memref<9x8x8xf32, #tpu.memory_space<vmem>>, %arg5: memref<4x8x16xf32, #tpu.memory_space<vmem>>, %arg6: memref<8x16xf32, #tpu.memory_space<vmem>>, %arg7: memref<1x8x64xf32, #tpu.memory_space<vmem>>) attributes {dimension_semantics = [#tpu.dimension_semantics<parallel>], iteration_bounds = array<i64: 2>, scalar_prefetch = 0 : i64, scratch_operands = 0 : i64, tpu.core_type = #tpu.core_type<tc>, window_params = [{transform_indices = @transform_0, window_bounds = array<i64: 1, 8, 82>}, {transform_indices = @transform_1, window_bounds = array<i64: 1, 16, 82>}, {pipeline_mode = #tpu.pipeline_mode<synchronous>, transform_indices = @transform_2, window_bounds = array<i64: 2, 64>}, {pipeline_mode = #tpu.pipeline_mode<synchronous>, transform_indices = @transform_3, window_bounds = array<i64: 9, 8, 8>}, {pipeline_mode = #tpu.pipeline_mode<synchronous>, transform_indices = @transform_4, window_bounds = array<i64: 4, 8, 16>}, {pipeline_mode = #tpu.pipeline_mode<synchronous>, transform_indices = @transform_5, window_bounds = array<i64: 8, 16>}, {transform_indices = @transform_6, window_bounds = array<i64: 1, 8, 64>}]} {
    %c0 = arith.constant 0 : index
    %c0_0 = arith.constant 0 : index
    %0 = vector.load %arg3[%c0, %c0_0] : memref<2x64xf32, #tpu.memory_space<vmem>>, vector<1x64xf32>
    %c1 = arith.constant 1 : index
    %c0_1 = arith.constant 0 : index
    %1 = vector.load %arg3[%c1, %c0_1] : memref<2x64xf32, #tpu.memory_space<vmem>>, vector<1x64xf32>
    %c0_2 = arith.constant 0 : index
    %c0_3 = arith.constant 0 : index
    %c0_4 = arith.constant 0 : index
    %2 = vector.load %arg2[%c0_2, %c0_3, %c0_4] : memref<1x16x82xf32, #tpu.memory_space<vmem>>, vector<1x16x82xf32>
    %3 = vector.shape_cast %2 : vector<1x16x82xf32> to vector<16x82xf32>
    %cst = arith.constant dense<0.000000e+00> : vector<16xf32>
    %4 = vector.multi_reduction <add>, %3, %cst [1] : vector<16x82xf32> to vector<16xf32>
    %5 = vector.shape_cast %4 : vector<16xf32> to vector<16x1xf32>
    %cst_5 = arith.constant 3.906250e-03 : f32
    %6 = vector.broadcast %cst_5 : f32 to vector<16x1xf32>
    %7 = arith.mulf %5, %6 : vector<16x1xf32>
    %c0_6 = arith.constant 0 : index
    %c0_7 = arith.constant 0 : index
    %8 = vector.load %arg6[%c0_6, %c0_7] : memref<8x16xf32, #tpu.memory_space<vmem>>, vector<8x16xf32>
    %cst_8 = arith.constant dense<0.000000e+00> : vector<8x1xf32>
    %9 = tpu.matmul %8, %7, %cst_8 {dimension_numbers = #tpu.dot_dimension_numbers<[1], [0], [0], [1], [0, 0, 1, 1], [], []>} : vector<8x16xf32>, vector<16x1xf32>, vector<8x1xf32> -> vector<8x1xf32>
    %cst_9 = arith.constant 0.000000e+00 : f32
    %10 = vector.broadcast %cst_9 : f32 to vector<8x1xf32>
    %11 = arith.maximumf %9, %10 : vector<8x1xf32>
    %cst_10 = arith.constant 0.000000e+00 : f32
    %12 = vector.broadcast %cst_10 : f32 to vector<8x64xf32>
    %c0_11 = arith.constant 0 : index
    %c0_12 = arith.constant 0 : index
    %c0_13 = arith.constant 0 : index
    %13 = vector.load %arg1[%c0_11, %c0_12, %c0_13] : memref<1x8x82xf32, #tpu.memory_space<vmem>>, vector<1x8x64xf32>
    %14 = vector.shape_cast %13 : vector<1x8x64xf32> to vector<8x64xf32>
    %15 = vector.broadcast %0 : vector<1x64xf32> to vector<8x64xf32>
    %16 = arith.mulf %14, %15 : vector<8x64xf32>
    %c0_14 = arith.constant 0 : index
    %c0_15 = arith.constant 0 : index
    %c0_16 = arith.constant 0 : index
    %17 = vector.load %arg4[%c0_14, %c0_15, %c0_16] : memref<9x8x8xf32, #tpu.memory_space<vmem>>, vector<1x8x8xf32>
    %18 = vector.shape_cast %17 : vector<1x8x8xf32> to vector<8x8xf32>
    %cst_17 = arith.constant dense<0.000000e+00> : vector<8x64xf32>
    %19 = tpu.matmul %18, %16, %cst_17 {dimension_numbers = #tpu.dot_dimension_numbers<[1], [0], [0], [1], [0, 0, 1, 1], [], []>} : vector<8x8xf32>, vector<8x64xf32>, vector<8x64xf32> -> vector<8x64xf32>
    %20 = arith.addf %12, %19 : vector<8x64xf32>
    %c0_18 = arith.constant 0 : index
    %c0_19 = arith.constant 0 : index
    %c1_20 = arith.constant 1 : index
    %21 = vector.load %arg1[%c0_18, %c0_19, %c1_20] : memref<1x8x82xf32, #tpu.memory_space<vmem>>, vector<1x8x64xf32>
    %22 = vector.shape_cast %21 : vector<1x8x64xf32> to vector<8x64xf32>
    %c1_21 = arith.constant 1 : index
    %c0_22 = arith.constant 0 : index
    %c0_23 = arith.constant 0 : index
    %23 = vector.load %arg4[%c1_21, %c0_22, %c0_23] : memref<9x8x8xf32, #tpu.memory_space<vmem>>, vector<1x8x8xf32>
    %24 = vector.shape_cast %23 : vector<1x8x8xf32> to vector<8x8xf32>
    %cst_24 = arith.constant dense<0.000000e+00> : vector<8x64xf32>
    %25 = tpu.matmul %24, %22, %cst_24 {dimension_numbers = #tpu.dot_dimension_numbers<[1], [0], [0], [1], [0, 0, 1, 1], [], []>} : vector<8x8xf32>, vector<8x64xf32>, vector<8x64xf32> -> vector<8x64xf32>
    %26 = arith.addf %20, %25 : vector<8x64xf32>
    %c0_25 = arith.constant 0 : index
    %c0_26 = arith.constant 0 : index
    %c2 = arith.constant 2 : index
    %27 = vector.load %arg1[%c0_25, %c0_26, %c2] : memref<1x8x82xf32, #tpu.memory_space<vmem>>, vector<1x8x64xf32>
    %28 = vector.shape_cast %27 : vector<1x8x64xf32> to vector<8x64xf32>
    %29 = vector.broadcast %1 : vector<1x64xf32> to vector<8x64xf32>
    %30 = arith.mulf %28, %29 : vector<8x64xf32>
    %c2_27 = arith.constant 2 : index
    %c0_28 = arith.constant 0 : index
    %c0_29 = arith.constant 0 : index
    %31 = vector.load %arg4[%c2_27, %c0_28, %c0_29] : memref<9x8x8xf32, #tpu.memory_space<vmem>>, vector<1x8x8xf32>
    %32 = vector.shape_cast %31 : vector<1x8x8xf32> to vector<8x8xf32>
    %cst_30 = arith.constant dense<0.000000e+00> : vector<8x64xf32>
    %33 = tpu.matmul %32, %30, %cst_30 {dimension_numbers = #tpu.dot_dimension_numbers<[1], [0], [0], [1], [0, 0, 1, 1], [], []>} : vector<8x8xf32>, vector<8x64xf32>, vector<8x64xf32> -> vector<8x64xf32>
    %34 = arith.addf %26, %33 : vector<8x64xf32>
    %c0_31 = arith.constant 0 : index
    %c0_32 = arith.constant 0 : index
    %c8 = arith.constant 8 : index
    %35 = vector.load %arg1[%c0_31, %c0_32, %c8] : memref<1x8x82xf32, #tpu.memory_space<vmem>>, vector<1x8x64xf32>
    %36 = vector.shape_cast %35 : vector<1x8x64xf32> to vector<8x64xf32>
    %37 = vector.broadcast %0 : vector<1x64xf32> to vector<8x64xf32>
    %38 = arith.mulf %36, %37 : vector<8x64xf32>
    %c3 = arith.constant 3 : index
    %c0_33 = arith.constant 0 : index
    %c0_34 = arith.constant 0 : index
    %39 = vector.load %arg4[%c3, %c0_33, %c0_34] : memref<9x8x8xf32, #tpu.memory_space<vmem>>, vector<1x8x8xf32>
    %40 = vector.shape_cast %39 : vector<1x8x8xf32> to vector<8x8xf32>
    %cst_35 = arith.constant dense<0.000000e+00> : vector<8x64xf32>
    %41 = tpu.matmul %40, %38, %cst_35 {dimension_numbers = #tpu.dot_dimension_numbers<[1], [0], [0], [1], [0, 0, 1, 1], [], []>} : vector<8x8xf32>, vector<8x64xf32>, vector<8x64xf32> -> vector<8x64xf32>
    %42 = arith.addf %34, %41 : vector<8x64xf32>
    %c0_36 = arith.constant 0 : index
    %c0_37 = arith.constant 0 : index
    %c9 = arith.constant 9 : index
    %43 = vector.load %arg1[%c0_36, %c0_37, %c9] : memref<1x8x82xf32, #tpu.memory_space<vmem>>, vector<1x8x64xf32>
    %44 = vector.shape_cast %43 : vector<1x8x64xf32> to vector<8x64xf32>
    %c4 = arith.constant 4 : index
    %c0_38 = arith.constant 0 : index
    %c0_39 = arith.constant 0 : index
    %45 = vector.load %arg4[%c4, %c0_38, %c0_39] : memref<9x8x8xf32, #tpu.memory_space<vmem>>, vector<1x8x8xf32>
    %46 = vector.shape_cast %45 : vector<1x8x8xf32> to vector<8x8xf32>
    %cst_40 = arith.constant dense<0.000000e+00> : vector<8x64xf32>
    %47 = tpu.matmul %46, %44, %cst_40 {dimension_numbers = #tpu.dot_dimension_numbers<[1], [0], [0], [1], [0, 0, 1, 1], [], []>} : vector<8x8xf32>, vector<8x64xf32>, vector<8x64xf32> -> vector<8x64xf32>
    %48 = arith.addf %42, %47 : vector<8x64xf32>
    %c0_41 = arith.constant 0 : index
    %c0_42 = arith.constant 0 : index
    %c10 = arith.constant 10 : index
    %49 = vector.load %arg1[%c0_41, %c0_42, %c10] : memref<1x8x82xf32, #tpu.memory_space<vmem>>, vector<1x8x64xf32>
    %50 = vector.shape_cast %49 : vector<1x8x64xf32> to vector<8x64xf32>
    %51 = vector.broadcast %1 : vector<1x64xf32> to vector<8x64xf32>
    %52 = arith.mulf %50, %51 : vector<8x64xf32>
    %c5 = arith.constant 5 : index
    %c0_43 = arith.constant 0 : index
    %c0_44 = arith.constant 0 : index
    %53 = vector.load %arg4[%c5, %c0_43, %c0_44] : memref<9x8x8xf32, #tpu.memory_space<vmem>>, vector<1x8x8xf32>
    %54 = vector.shape_cast %53 : vector<1x8x8xf32> to vector<8x8xf32>
    %cst_45 = arith.constant dense<0.000000e+00> : vector<8x64xf32>
    %55 = tpu.matmul %54, %52, %cst_45 {dimension_numbers = #tpu.dot_dimension_numbers<[1], [0], [0], [1], [0, 0, 1, 1], [], []>} : vector<8x8xf32>, vector<8x64xf32>, vector<8x64xf32> -> vector<8x64xf32>
    %56 = arith.addf %48, %55 : vector<8x64xf32>
    %c0_46 = arith.constant 0 : index
    %c0_47 = arith.constant 0 : index
    %c16 = arith.constant 16 : index
    %57 = vector.load %arg1[%c0_46, %c0_47, %c16] : memref<1x8x82xf32, #tpu.memory_space<vmem>>, vector<1x8x64xf32>
    %58 = vector.shape_cast %57 : vector<1x8x64xf32> to vector<8x64xf32>
    %59 = vector.broadcast %0 : vector<1x64xf32> to vector<8x64xf32>
    %60 = arith.mulf %58, %59 : vector<8x64xf32>
    %c6 = arith.constant 6 : index
    %c0_48 = arith.constant 0 : index
    %c0_49 = arith.constant 0 : index
    %61 = vector.load %arg4[%c6, %c0_48, %c0_49] : memref<9x8x8xf32, #tpu.memory_space<vmem>>, vector<1x8x8xf32>
    %62 = vector.shape_cast %61 : vector<1x8x8xf32> to vector<8x8xf32>
    %cst_50 = arith.constant dense<0.000000e+00> : vector<8x64xf32>
    %63 = tpu.matmul %62, %60, %cst_50 {dimension_numbers = #tpu.dot_dimension_numbers<[1], [0], [0], [1], [0, 0, 1, 1], [], []>} : vector<8x8xf32>, vector<8x64xf32>, vector<8x64xf32> -> vector<8x64xf32>
    %64 = arith.addf %56, %63 : vector<8x64xf32>
    %c0_51 = arith.constant 0 : index
    %c0_52 = arith.constant 0 : index
    %c17 = arith.constant 17 : index
    %65 = vector.load %arg1[%c0_51, %c0_52, %c17] : memref<1x8x82xf32, #tpu.memory_space<vmem>>, vector<1x8x64xf32>
    %66 = vector.shape_cast %65 : vector<1x8x64xf32> to vector<8x64xf32>
    %c7 = arith.constant 7 : index
    %c0_53 = arith.constant 0 : index
    %c0_54 = arith.constant 0 : index
    %67 = vector.load %arg4[%c7, %c0_53, %c0_54] : memref<9x8x8xf32, #tpu.memory_space<vmem>>, vector<1x8x8xf32>
    %68 = vector.shape_cast %67 : vector<1x8x8xf32> to vector<8x8xf32>
    %cst_55 = arith.constant dense<0.000000e+00> : vector<8x64xf32>
    %69 = tpu.matmul %68, %66, %cst_55 {dimension_numbers = #tpu.dot_dimension_numbers<[1], [0], [0], [1], [0, 0, 1, 1], [], []>} : vector<8x8xf32>, vector<8x64xf32>, vector<8x64xf32> -> vector<8x64xf32>
    %70 = arith.addf %64, %69 : vector<8x64xf32>
    %c0_56 = arith.constant 0 : index
    %c0_57 = arith.constant 0 : index
    %c18 = arith.constant 18 : index
    %71 = vector.load %arg1[%c0_56, %c0_57, %c18] : memref<1x8x82xf32, #tpu.memory_space<vmem>>, vector<1x8x64xf32>
    %72 = vector.shape_cast %71 : vector<1x8x64xf32> to vector<8x64xf32>
    %73 = vector.broadcast %1 : vector<1x64xf32> to vector<8x64xf32>
    %74 = arith.mulf %72, %73 : vector<8x64xf32>
    %c8_58 = arith.constant 8 : index
    %c0_59 = arith.constant 0 : index
    %c0_60 = arith.constant 0 : index
    %75 = vector.load %arg4[%c8_58, %c0_59, %c0_60] : memref<9x8x8xf32, #tpu.memory_space<vmem>>, vector<1x8x8xf32>
    %76 = vector.shape_cast %75 : vector<1x8x8xf32> to vector<8x8xf32>
    %cst_61 = arith.constant dense<0.000000e+00> : vector<8x64xf32>
    %77 = tpu.matmul %76, %74, %cst_61 {dimension_numbers = #tpu.dot_dimension_numbers<[1], [0], [0], [1], [0, 0, 1, 1], [], []>} : vector<8x8xf32>, vector<8x64xf32>, vector<8x64xf32> -> vector<8x64xf32>
    %78 = arith.addf %70, %77 : vector<8x64xf32>
    %cst_62 = arith.constant 0.000000e+00 : f32
    %79 = vector.broadcast %cst_62 : f32 to vector<8x64xf32>
    %c0_63 = arith.constant 0 : index
    %c0_64 = arith.constant 0 : index
    %c0_65 = arith.constant 0 : index
    %80 = vector.load %arg2[%c0_63, %c0_64, %c0_65] : memref<1x16x82xf32, #tpu.memory_space<vmem>>, vector<1x16x64xf32>
    %81 = vector.shape_cast %80 : vector<1x16x64xf32> to vector<16x64xf32>
    %82 = vector.broadcast %0 : vector<1x64xf32> to vector<16x64xf32>
    %83 = arith.mulf %81, %82 : vector<16x64xf32>
    %c0_66 = arith.constant 0 : index
    %c0_67 = arith.constant 0 : index
    %c0_68 = arith.constant 0 : index
    %84 = vector.load %arg5[%c0_66, %c0_67, %c0_68] : memref<4x8x16xf32, #tpu.memory_space<vmem>>, vector<1x8x16xf32>
    %85 = vector.shape_cast %84 : vector<1x8x16xf32> to vector<8x16xf32>
    %cst_69 = arith.constant dense<0.000000e+00> : vector<8x64xf32>
    %86 = tpu.matmul %85, %83, %cst_69 {dimension_numbers = #tpu.dot_dimension_numbers<[1], [0], [0], [1], [0, 0, 1, 1], [], []>} : vector<8x16xf32>, vector<16x64xf32>, vector<8x64xf32> -> vector<8x64xf32>
    %87 = arith.addf %79, %86 : vector<8x64xf32>
    %c0_70 = arith.constant 0 : index
    %c0_71 = arith.constant 0 : index
    %c1_72 = arith.constant 1 : index
    %88 = vector.load %arg2[%c0_70, %c0_71, %c1_72] : memref<1x16x82xf32, #tpu.memory_space<vmem>>, vector<1x16x64xf32>
    %89 = vector.shape_cast %88 : vector<1x16x64xf32> to vector<16x64xf32>
    %c1_73 = arith.constant 1 : index
    %c0_74 = arith.constant 0 : index
    %c0_75 = arith.constant 0 : index
    %90 = vector.load %arg5[%c1_73, %c0_74, %c0_75] : memref<4x8x16xf32, #tpu.memory_space<vmem>>, vector<1x8x16xf32>
    %91 = vector.shape_cast %90 : vector<1x8x16xf32> to vector<8x16xf32>
    %cst_76 = arith.constant dense<0.000000e+00> : vector<8x64xf32>
    %92 = tpu.matmul %91, %89, %cst_76 {dimension_numbers = #tpu.dot_dimension_numbers<[1], [0], [0], [1], [0, 0, 1, 1], [], []>} : vector<8x16xf32>, vector<16x64xf32>, vector<8x64xf32> -> vector<8x64xf32>
    %93 = arith.addf %87, %92 : vector<8x64xf32>
    %c0_77 = arith.constant 0 : index
    %c0_78 = arith.constant 0 : index
    %c8_79 = arith.constant 8 : index
    %94 = vector.load %arg2[%c0_77, %c0_78, %c8_79] : memref<1x16x82xf32, #tpu.memory_space<vmem>>, vector<1x16x64xf32>
    %95 = vector.shape_cast %94 : vector<1x16x64xf32> to vector<16x64xf32>
    %96 = vector.broadcast %0 : vector<1x64xf32> to vector<16x64xf32>
    %97 = arith.mulf %95, %96 : vector<16x64xf32>
    %c2_80 = arith.constant 2 : index
    %c0_81 = arith.constant 0 : index
    %c0_82 = arith.constant 0 : index
    %98 = vector.load %arg5[%c2_80, %c0_81, %c0_82] : memref<4x8x16xf32, #tpu.memory_space<vmem>>, vector<1x8x16xf32>
    %99 = vector.shape_cast %98 : vector<1x8x16xf32> to vector<8x16xf32>
    %cst_83 = arith.constant dense<0.000000e+00> : vector<8x64xf32>
    %100 = tpu.matmul %99, %97, %cst_83 {dimension_numbers = #tpu.dot_dimension_numbers<[1], [0], [0], [1], [0, 0, 1, 1], [], []>} : vector<8x16xf32>, vector<16x64xf32>, vector<8x64xf32> -> vector<8x64xf32>
    %101 = arith.addf %93, %100 : vector<8x64xf32>
    %c0_84 = arith.constant 0 : index
    %c0_85 = arith.constant 0 : index
    %c9_86 = arith.constant 9 : index
    %102 = vector.load %arg2[%c0_84, %c0_85, %c9_86] : memref<1x16x82xf32, #tpu.memory_space<vmem>>, vector<1x16x64xf32>
    %103 = vector.shape_cast %102 : vector<1x16x64xf32> to vector<16x64xf32>
    %c3_87 = arith.constant 3 : index
    %c0_88 = arith.constant 0 : index
    %c0_89 = arith.constant 0 : index
    %104 = vector.load %arg5[%c3_87, %c0_88, %c0_89] : memref<4x8x16xf32, #tpu.memory_space<vmem>>, vector<1x8x16xf32>
    %105 = vector.shape_cast %104 : vector<1x8x16xf32> to vector<8x16xf32>
    %cst_90 = arith.constant dense<0.000000e+00> : vector<8x64xf32>
    %106 = tpu.matmul %105, %103, %cst_90 {dimension_numbers = #tpu.dot_dimension_numbers<[1], [0], [0], [1], [0, 0, 1, 1], [], []>} : vector<8x16xf32>, vector<16x64xf32>, vector<8x64xf32> -> vector<8x64xf32>
    %107 = arith.addf %101, %106 : vector<8x64xf32>
    %108 = vector.broadcast %11 : vector<8x1xf32> to vector<8x64xf32>
    %109 = arith.mulf %78, %108 : vector<8x64xf32>
    %110 = arith.addf %107, %109 : vector<8x64xf32>
    %cst_91 = arith.constant 0.000000e+00 : f32
    %111 = vector.broadcast %cst_91 : f32 to vector<8x64xf32>
    %112 = arith.maximumf %110, %111 : vector<8x64xf32>
    %c0_92 = arith.constant 0 : index
    %c0_93 = arith.constant 0 : index
    %c0_94 = arith.constant 0 : index
    %113 = vector.load %arg7[%c0_92, %c0_93, %c0_94] : memref<1x8x64xf32, #tpu.memory_space<vmem>>, vector<1x8x64xf32>
    %114 = vector.shape_cast %113 : vector<1x8x64xf32> to vector<8x64xf32>
    %115 = vector.shape_cast %112 : vector<8x64xf32> to vector<1x8x64xf32>
    tpu.vector_store %arg7[%c0_92, %c0_93, %c0_94], %115 {strides = array<i32>} : memref<1x8x64xf32, #tpu.memory_space<vmem>>, vector<1x8x64xf32>,
    return
  }
  func.func @transform_0(%arg0: i32) -> (i32, i32, i32) {
    %c0_i32 = arith.constant 0 : i32
    %c0_i32_0 = arith.constant 0 : i32
    %c0_i32_1 = arith.constant 0 : i32
    return %arg0, %c0_i32, %c0_i32_0 : i32, i32, i32
  }
  func.func @transform_1(%arg0: i32) -> (i32, i32, i32) {
    %c0_i32 = arith.constant 0 : i32
    %c0_i32_0 = arith.constant 0 : i32
    %c0_i32_1 = arith.constant 0 : i32
    return %arg0, %c0_i32, %c0_i32_0 : i32, i32, i32
  }
  func.func @transform_2(%arg0: i32) -> (i32, i32) {
    %c0_i32 = arith.constant 0 : i32
    %c0_i32_0 = arith.constant 0 : i32
    %c0_i32_1 = arith.constant 0 : i32
    return %c0_i32, %c0_i32_0 : i32, i32
  }
  func.func @transform_3(%arg0: i32) -> (i32, i32, i32) {
    %c0_i32 = arith.constant 0 : i32
    %c0_i32_0 = arith.constant 0 : i32
    %c0_i32_1 = arith.constant 0 : i32
    %c0_i32_2 = arith.constant 0 : i32
    return %c0_i32, %c0_i32_0, %c0_i32_1 : i32, i32, i32
  }
  func.func @transform_4(%arg0: i32) -> (i32, i32, i32) {
    %c0_i32 = arith.constant 0 : i32
    %c0_i32_0 = arith.constant 0 : i32
    %c0_i32_1 = arith.constant 0 : i32
    %c0_i32_2 = arith.constant 0 : i32
    return %c0_i32, %c0_i32_0, %c0_i32_1 : i32, i32, i32
  }
  func.func @transform_5(%arg0: i32) -> (i32, i32) {
    %c0_i32 = arith.constant 0 : i32
    %c0_i32_0 = arith.constant 0 : i32
    %c0_i32_1 = arith.constant 0 : i32
    return %c0_i32, %c0_i32_0 : i32, i32
  }
  func.func @transform_6(%arg0: i32) -> (i32, i32, i32) {
    %c0_i32 = arith.constant 0 : i32
    %c0_i32_0 = arith.constant 0 : i32
    %c0_i32_1 = arith.constant 0 : i32
    return %arg0, %c0_i32, %c0_i32_0 : i32, i32, i32
  }
}

</mosaic_0001>

<llo_original>
// kernel: tpu_custom_call.1
$region0: #{tpu_custom_call.1}
  #allocation0 [shape = 'u32[]', space=smem, size = 0x4, offset = 0x4, fixed_abs, tag = 'smem constant byte address 0x4 - core index']
  #allocation1 [shape = 'u32[72,128]{1,0:T(1,128)}', space=vmem, size = 0x9000, scoped, tag = 'internal scratch']
  %s0 = inlined_call_operand.vmem [shape: f32[2,8,82], index: 0, kind: input, shape index: {}]
  %s1 = inlined_call_operand.vmem [shape: f32[2,16,82], index: 1, kind: input, shape index: {}]
  %s2 = inlined_call_operand.vmem [shape: f32[2,64], index: 2, kind: input, shape index: {}]
  %s3 = inlined_call_operand.vmem [shape: f32[9,8,8], index: 3, kind: input, shape index: {}]
  %s4 = inlined_call_operand.vmem [shape: f32[4,8,16], index: 4, kind: input, shape index: {}]
  %s5 = inlined_call_operand.vmem [shape: f32[8,16], index: 5, kind: input, shape index: {}]
  %s6 = inlined_call_operand.hbm [shape: f32[2,8,64], index: 6, kind: output, shape index: {}]
  %s7 = sld [smem:[#allocation0]]
  $region57: #{tpu_custom_call.1} parent=0
    _
  %s9 = ssub.s32 1, %s7
  %s10 = scalar_select 0, %s9, %s7
  $region1: #{tpu_custom_call.1} parent=0
    #allocation2 [shape = 'u8[8192]{0}', space=vmem, size = 0x2000, scoped, tag = 'output window, operand 0']
    #allocation3 [shape = 's32[2]{0}', space=sflag, size = 0x8, scoped, tag = 'scoped memory for tpu_custom_call.1']
    %11 = vsyncpa [#allocation3], 0
    %s12 = scalar_lea.sflag [#allocation3], 1
    %13 = vsyncpa %s12, 0
    loop: start=0, step=1, limit=4
    $region2: #{tpu_custom_call.1} parent=1 // loop_pre_header
      _
    $region3: #{tpu_custom_call.1} parent=1 // loop_header
      %s15 = sphi 0, %s19
      %p16 = scmp.ge.s32.totalorder %s15, 4
      %s25 = sphi 0, %s27
      %s28 = sphi 0, %s25
      %s29 = sphi 0, %s28
      %s45 = sphi 0, %s29
      %s51 = sphi 0, %s53
      %s54 = sphi 0, %s51
      %s55 = sphi 0, %s54
      %s71 = sphi 0, %s55
      %s75 = sphi 0, %s75
      %s77 = sphi 0, %s75
      %s78 = sphi 0, %s77
      %s92 = sphi 0, %s78
      %s96 = sphi 0, %s96
      %s98 = sphi 0, %s96
      %s99 = sphi 0, %s98
      %s113 = sphi 0, %s99
      %s117 = sphi 0, %s117
      %s119 = sphi 0, %s117
      %s120 = sphi 0, %s119
      %s134 = sphi 0, %s120
      %s138 = sphi 0, %s138
      %s140 = sphi 0, %s138
      %s141 = sphi 0, %s140
      %s155 = sphi 0, %s141
      %s161 = sphi 0, %s163
      %s164 = sphi 0, %s161
      %s165 = sphi 0, %s164
      %s181 = sphi 0, %s165
    $region4: #{tpu_custom_call.1} parent=1 // loop_header_branch
      %18 = sbr.rel (%p16) target = $region8
    $region5: #{tpu_custom_call.1} parent=1 // loop_body
      %s20 = ssub.s32 %s15, 1
      %s21 = ssub.s32 %s15, 2
      %s22 = sadd.s32 %s15, 1
      %s23 = ssub.s32 %s15, %s22
      %p24 = scmp.eq.s32.totalorder %s23, 0
      %s26 = sadd.s32 %s25, 1
      %s27 = scalar_select %p24, %s25, %s26
      %p30 = pneg %p24
      %p31 = scmp.eq.s32.totalorder %s15, 1
      %p32 = por %p30, %p31
      %p33 = scmp.ne.s32.totalorder %s25, %s28
      %p34 = scmp.eq.s32.totalorder %s15, 0
      %p35 = por %p33, %p34
      %p36 = scmp.ne.s32.totalorder %s25, %s28
      %p37 = scmp.eq.s32.totalorder %s20, 1
      %p38 = por %p36, %p37
      %p39 = scmp.ne.s32.totalorder %s28, %s29
      %p40 = scmp.eq.s32.totalorder %s20, 0
      %p41 = por %p39, %p40
      %p42 = scmp.ne.s32.totalorder %s28, %s29
      %p43 = scmp.eq.s32.totalorder %s21, 1
      %p44 = por %p42, %p43
      %p46 = scmp.ne.s32.totalorder %s29, %s45
      %p47 = scmp.eq.s32.totalorder %s21, 0
      %p48 = por %p46, %p47
      %s49 = ssub.s32 %s15, %s22
      %p50 = scmp.eq.s32.totalorder %s49, 0
      %s52 = sadd.s32 %s51, 1
      %s53 = scalar_select %p50, %s51, %s52
      %p56 = pneg %p50
      %p57 = scmp.eq.s32.totalorder %s15, 1
      %p58 = por %p56, %p57
      %p59 = scmp.ne.s32.totalorder %s51, %s54
      %p60 = scmp.eq.s32.totalorder %s15, 0
      %p61 = por %p59, %p60
      %p62 = scmp.ne.s32.totalorder %s51, %s54
      %p63 = scmp.eq.s32.totalorder %s20, 1
      %p64 = por %p62, %p63
      %p65 = scmp.ne.s32.totalorder %s54, %s55
      %p66 = scmp.eq.s32.totalorder %s20, 0
      %p67 = por %p65, %p66
      %p68 = scmp.ne.s32.totalorder %s54, %s55
      %p69 = scmp.eq.s32.totalorder %s21, 1
      %p70 = por %p68, %p69
      %p72 = scmp.ne.s32.totalorder %s55, %s71
      %p73 = scmp.eq.s32.totalorder %s21, 0
      %p74 = por %p72, %p73
      %s76 = sadd.s32 %s75, 1
      %p79 = scmp.eq.s32.totalorder %s15, 1
      %p80 = scmp.ne.s32.totalorder %s75, %s77
      %p81 = scmp.eq.s32.totalorder %s15, 0
      %p82 = por %p80, %p81
      %p83 = scmp.ne.s32.totalorder %s75, %s77
      %p84 = scmp.eq.s32.totalorder %s20, 1
      %p85 = por %p83, %p84
      %p86 = scmp.ne.s32.totalorder %s77, %s78
      %p87 = scmp.eq.s32.totalorder %s20, 0
      %p88 = por %p86, %p87
      %p89 = scmp.ne.s32.totalorder %s77, %s78
      %p90 = scmp.eq.s32.totalorder %s21, 1
      %p91 = por %p89, %p90
      %p93 = scmp.ne.s32.totalorder %s78, %s92
      %p94 = scmp.eq.s32.totalorder %s21, 0
      %p95 = por %p93, %p94
      %s97 = sadd.s32 %s96, 1
      %p100 = scmp.eq.s32.totalorder %s15, 1
      %p101 = scmp.ne.s32.totalorder %s96, %s98
      %p102 = scmp.eq.s32.totalorder %s15, 0
      %p103 = por %p101, %p102
      %p104 = scmp.ne.s32.totalorder %s96, %s98
      %p105 = scmp.eq.s32.totalorder %s20, 1
      %p106 = por %p104, %p105
      %p107 = scmp.ne.s32.totalorder %s98, %s99
      %p108 = scmp.eq.s32.totalorder %s20, 0
      %p109 = por %p107, %p108
      %p110 = scmp.ne.s32.totalorder %s98, %s99
      %p111 = scmp.eq.s32.totalorder %s21, 1
      %p112 = por %p110, %p111
      %p114 = scmp.ne.s32.totalorder %s99, %s113
      %p115 = scmp.eq.s32.totalorder %s21, 0
      %p116 = por %p114, %p115
      %s118 = sadd.s32 %s117, 1
      %p121 = scmp.eq.s32.totalorder %s15, 1
      %p122 = scmp.ne.s32.totalorder %s117, %s119
      %p123 = scmp.eq.s32.totalorder %s15, 0
      %p124 = por %p122, %p123
      %p125 = scmp.ne.s32.totalorder %s117, %s119
      %p126 = scmp.eq.s32.totalorder %s20, 1
      %p127 = por %p125, %p126
      %p128 = scmp.ne.s32.totalorder %s119, %s120
      %p129 = scmp.eq.s32.totalorder %s20, 0
      %p130 = por %p128, %p129
      %p131 = scmp.ne.s32.totalorder %s119, %s120
      %p132 = scmp.eq.s32.totalorder %s21, 1
      %p133 = por %p131, %p132
      %p135 = scmp.ne.s32.totalorder %s120, %s134
      %p136 = scmp.eq.s32.totalorder %s21, 0
      %p137 = por %p135, %p136
      %s139 = sadd.s32 %s138, 1
      %p142 = scmp.eq.s32.totalorder %s15, 1
      %p143 = scmp.ne.s32.totalorder %s138, %s140
      %p144 = scmp.eq.s32.totalorder %s15, 0
      %p145 = por %p143, %p144
      %p146 = scmp.ne.s32.totalorder %s138, %s140
      %p147 = scmp.eq.s32.totalorder %s20, 1
      %p148 = por %p146, %p147
      %p149 = scmp.ne.s32.totalorder %s140, %s141
      %p150 = scmp.eq.s32.totalorder %s20, 0
      %p151 = por %p149, %p150
      %p152 = scmp.ne.s32.totalorder %s140, %s141
      %p153 = scmp.eq.s32.totalorder %s21, 1
      %p154 = por %p152, %p153
      %p156 = scmp.ne.s32.totalorder %s141, %s155
      %p157 = scmp.eq.s32.totalorder %s21, 0
      %p158 = por %p156, %p157
      %s159 = ssub.s32 %s15, %s22
      %p160 = scmp.eq.s32.totalorder %s159, 0
      %s162 = sadd.s32 %s161, 1
      %s163 = scalar_select %p160, %s161, %s162
      %p166 = pneg %p160
      %p167 = scmp.eq.s32.totalorder %s15, 1
      %p168 = por %p166, %p167
      %p169 = scmp.ne.s32.totalorder %s161, %s164
      %p170 = scmp.eq.s32.totalorder %s15, 0
      %p171 = por %p169, %p170
      %p172 = scmp.ne.s32.totalorder %s161, %s164
      %p173 = scmp.eq.s32.totalorder %s20, 1
      %p174 = por %p172, %p173
      %p175 = scmp.ne.s32.totalorder %s164, %s165
      %p176 = scmp.eq.s32.totalorder %s20, 0
      %p177 = por %p175, %p176
      %p178 = scmp.ne.s32.totalorder %s164, %s165
      %p179 = scmp.eq.s32.totalorder %s21, 1
      %p180 = por %p178, %p179
      %p182 = scmp.ne.s32.totalorder %s165, %s181
      %p183 = scmp.eq.s32.totalorder %s21, 0
      %p184 = por %p182, %p183
      %p185 = scmp.le.s32.totalorder 1, %s15
      %p186 = scmp.lt.s32.totalorder %s15, 3
      %p187 = pnand %p185, %p186
      %p188 = pneg %p187
      // Predicated region
      $region9: #{tpu_custom_call.1} parent=5 // pred_check
        _
      $region10: #{tpu_custom_call.1} parent=5 // pred_check_branch
        %190 = sbr.rel (%p187) target = $region12
      $region11: #{tpu_custom_call.1} parent=5 // pred_region
        %s191 = ssub.s32 %s15, 1
        // Predicated region
        $region13: #{tpu_custom_call.1} parent=11 // pred_check
          %p192 = pneg %p88
        $region14: #{tpu_custom_call.1} parent=11 // pred_check_branch
          %194 = sbr.rel (%p192) target = $region16
        $region15: #{tpu_custom_call.1} parent=11 // pred_region
          _
        $region16: #{tpu_custom_call.1} parent=11 // pred_fallthru
          _
        // Predicated region
        $region17: #{tpu_custom_call.1} parent=11 // pred_check
          %p195 = pneg %p109
        $region18: #{tpu_custom_call.1} parent=11 // pred_check_branch
          %197 = sbr.rel (%p195) target = $region20
        $region19: #{tpu_custom_call.1} parent=11 // pred_region
          _
        $region20: #{tpu_custom_call.1} parent=11 // pred_fallthru
          _
        // Predicated region
        $region21: #{tpu_custom_call.1} parent=11 // pred_check
          %p198 = pneg %p130
        $region22: #{tpu_custom_call.1} parent=11 // pred_check_branch
          %200 = sbr.rel (%p198) target = $region24
        $region23: #{tpu_custom_call.1} parent=11 // pred_region
          _
        $region24: #{tpu_custom_call.1} parent=11 // pred_fallthru
          _
        // Predicated region
        $region25: #{tpu_custom_call.1} parent=11 // pred_check
          %p201 = pneg %p151
        $region26: #{tpu_custom_call.1} parent=11 // pred_check_branch
          %203 = sbr.rel (%p201) target = $region28
        $region27: #{tpu_custom_call.1} parent=11 // pred_region
          _
        $region28: #{tpu_custom_call.1} parent=11 // pred_fallthru
          _
      $region12: #{tpu_custom_call.1} parent=5 // pred_fallthru
        _
      %p204 = scmp.lt.s32.totalorder %s15, 2
      // Predicated region
      $region29: #{tpu_custom_call.1} parent=5 // pred_check
        %p205 = pneg %p204
      $region30: #{tpu_custom_call.1} parent=5 // pred_check_branch
        %207 = sbr.rel (%p205) target = $region32
      $region31: #{tpu_custom_call.1} parent=5 // pred_region
        // Predicated region
        $region33: #{tpu_custom_call.1} parent=31 // pred_check
          %p208 = pneg %p35
        $region34: #{tpu_custom_call.1} parent=31 // pred_check_branch
          %210 = sbr.rel (%p208) target = $region36
        $region35: #{tpu_custom_call.1} parent=31 // pred_region
          %p211 = scmp.lt.s32.totalorder %s15, 1
          %s212 = scalar_select %p211, %s15, 1
          %s213 = smul.addr %s212, 8
          %s214 = scalar_lea.vmem %s0, %s213
        $region36: #{tpu_custom_call.1} parent=31 // pred_fallthru
          _
        // Predicated region
        $region37: #{tpu_custom_call.1} parent=31 // pred_check
          %p215 = pneg %p61
        $region38: #{tpu_custom_call.1} parent=31 // pred_check_branch
          %217 = sbr.rel (%p215) target = $region40
        $region39: #{tpu_custom_call.1} parent=31 // pred_region
          %p218 = scmp.lt.s32.totalorder %s15, 1
          %s219 = scalar_select %p218, %s15, 1
          %s220 = smul.addr %s219, 2
          %s221 = smul.addr %s220, 8
          %s222 = scalar_lea.vmem %s1, %s221
        $region40: #{tpu_custom_call.1} parent=31 // pred_fallthru
          _
      $region32: #{tpu_custom_call.1} parent=5 // pred_fallthru
        _
      %p223 = scmp.le.s32.totalorder 1, %s15
      %p224 = scmp.lt.s32.totalorder %s15, 3
      %p225 = pnand %p223, %p224
      %p226 = pneg %p225
      // Predicated region
      $region41: #{tpu_custom_call.1} parent=5 // pred_check
        _
      $region42: #{tpu_custom_call.1} parent=5 // pred_check_branch
        %228 = sbr.rel (%p225) target = $region44
      $region43: #{tpu_custom_call.1} parent=5 // pred_region
        %s229 = ssub.s32 %s15, 1
        %p230 = scmp.lt.s32.totalorder %s20, 1
        %s231 = scalar_select %p230, %s20, 1
        %s232 = smul.addr %s231, 8
        %s233 = scalar_lea.vmem %s0, %s232
        %p234 = pneg %p41
        %p235 = pneg %p38
        %p236 = scmp.lt.s32.totalorder %s20, 1
        %s237 = scalar_select %p236, %s20, 1
        %s238 = smul.addr %s237, 2
        %s239 = smul.addr %s238, 8
        %s240 = scalar_lea.vmem %s1, %s239
        %p241 = pneg %p67
        %p242 = pneg %p64
        %p243 = pneg %p88
        %p244 = pneg %p85
        %p245 = pneg %p109
        %p246 = pneg %p106
        %p247 = pneg %p130
        %p248 = pneg %p127
        %p249 = pneg %p151
        %p250 = pneg %p148
        %p251 = pneg %p177
        %p252 = pneg %p174
        %s253 = sand.u32 %s164, 1
        %s254 = scalar_lea.sflag [#allocation3], %s253
        %s255 = sand.u32 %s164, 1
        %s256 = smul.addr %s255, 8
        %s257 = scalar_lea.vmem [#allocation2], %s256
        %p258 = scmp.lt.s32.totalorder %s20, 1
        %s259 = scalar_select %p258, %s20, 1
        %s260 = smul.addr %s259, 8
        %s261 = scalar_lea.vmem %s0, %s260
        %p262 = scmp.lt.s32.totalorder %s20, 1
        %s263 = scalar_select %p262, %s20, 1
        %s264 = smul.addr %s263, 2
        %s265 = smul.addr %s264, 8
        %s266 = scalar_lea.vmem %s1, %s265
        %v267 = vld [vmem:[%s2] sm:$0x1]
        %v268 = vld [vmem:[%s2 + $0x1] sm:$0x1]
        %v269 = vld [vmem:[%s266] sm:$0xff]
        %v270 = vld [vmem:[%s266 + $0x8] sm:$0xff]
        %vm271 = vcmask 670720
        %v272 = vsel %vm271, %v269, 0.0
        %273 = vadd.xlane.f32.xlu0 %v272
        %v274 = vpop.xlane.xlu0 %273
        %v275 = vsel %vm271, %v270, 0.0
        %276 = vadd.xlane.f32.xlu0 %v275
        %v277 = vpop.xlane.xlu0 %276
        %v278 = vmul.f32 %v274, 0.00390625
        %v279 = vmul.f32 %v277, 0.00390625
        %v280 = vld [vmem:[%s5] sm:$0xff]
        %vm281 = vcmask 130048
        %v283 = vsel %vm281, %v280, 0
        %285 = vmatpush.msra.mxu0 0.0
        %286 = vmatpush.msra.mxu0 0.0
        %287 = vmatpush.msra.mxu0 0.0
        %288 = vmatpush.msra.mxu0 0.0
        %289 = vmatpush.msra.mxu0 0.0
        %290 = vmatpush.msra.mxu0 0.0
        %291 = vmatpush.msra.mxu0 0.0
        %292 = vmatpush.msra.mxu0 0.0
        %293 = vmatpush.msra.mxu0 0.0
        %294 = vmatpush.msra.mxu0 0.0
        %295 = vmatpush.msra.mxu0 0.0
        %296 = vmatpush.msra.mxu0 0.0
        %297 = vmatpush.msra.mxu0 0.0
        %298 = vmatpush.msra.mxu0 0.0
        %299 = vmatpush.msra.mxu0 %v279
        %300 = vmatpush.msra.mxu0 %v278
        %301 = vmatmul.f32.gmra.mxu0 %v283
        %v302 = vpop.f32.mrf.mxu0
        %v303 = vadd.f32 0.0, %v302
        %304 = vdwg.mxu0
        %v305 = vmax.f32 %v303, 0.0
        %v306 = vld [vmem:[%s261] sm:$0xff]
        %v307 = vperm.slane %v267, 0
        %v308 = vmul.f32 %v306, %v307
        %v309 = vld [vmem:[%s3] sm:$0xff]
        %s310 = scalar_lea.vmem %s3, 8
        %v311 = vld [vmem:[%s310] sm:$0xff]
        %313 = vrot.lane.b32.xlu0 %v306, 127
        %v314 = vpop.permute.xlu0 %313
        %vm316 = vcmask 64512
        %v318 = vsel %vm316, %v311, 0
        %320 = vmatpush.msra.mxu0 0.0
        %321 = vmatpush.msra.mxu0 0.0
        %322 = vmatpush.msra.mxu0 0.0
        %323 = vmatpush.msra.mxu0 0.0
        %324 = vmatpush.msra.mxu0 0.0
        %325 = vmatpush.msra.mxu0 0.0
        %326 = vmatpush.msra.mxu0 0.0
        %327 = vmatpush.msra.mxu0 0.0
        %328 = vmatpush.msra.mxu0 0.0
        %329 = vmatpush.msra.mxu0 0.0
        %330 = vmatpush.msra.mxu0 0.0
        %331 = vmatpush.msra.mxu0 0.0
        %332 = vmatpush.msra.mxu0 0.0
        %333 = vmatpush.msra.mxu0 0.0
        %334 = vmatpush.msra.mxu0 0.0
        %335 = vmatpush.msra.mxu0 %v314
        %336 = vmatmul.f32.gmra.mxu0 %v318
        %v337 = vpop.f32.mrf.mxu0
        %v338 = vadd.f32 0.0, %v337
        %339 = vdwg.mxu0
        %v341 = vsel %vm316, %v309, 0
        %343 = vmatpush.msra.mxu0 0.0
        %344 = vmatpush.msra.mxu0 0.0
        %345 = vmatpush.msra.mxu0 0.0
        %346 = vmatpush.msra.mxu0 0.0
        %347 = vmatpush.msra.mxu0 0.0
        %348 = vmatpush.msra.mxu0 0.0
        %349 = vmatpush.msra.mxu0 0.0
        %350 = vmatpush.msra.mxu0 0.0
        %351 = vmatpush.msra.mxu0 0.0
        %352 = vmatpush.msra.mxu0 0.0
        %353 = vmatpush.msra.mxu0 0.0
        %354 = vmatpush.msra.mxu0 0.0
        %355 = vmatpush.msra.mxu0 0.0
        %356 = vmatpush.msra.mxu0 0.0
        %357 = vmatpush.msra.mxu0 0.0
        %358 = vmatpush.msra.mxu0 %v308
        %359 = vmatmul.f32.gmra.mxu0 %v341
        %v360 = vpop.f32.mrf.mxu0
        %v361 = vadd.f32 %v338, %v360
        %362 = vdwg.mxu0
        %v363 = vperm.slane %v268, 0
        %365 = vrot.lane.b32.xlu0 %v363, 2
        %v366 = vpop.permute.xlu0 %365
        %v368 = vmul.f32 %v306, %v366
        %s369 = scalar_lea.vmem %s3, 16
        %v370 = vld [vmem:[%s369] sm:$0xff]
        %372 = vrot.lane.b32.xlu0 %v368, 126
        %v373 = vpop.permute.xlu0 %372
        %v376 = vsel %vm316, %v370, 0
        %378 = vmatpush.msra.mxu0 0.0
        %379 = vmatpush.msra.mxu0 0.0
        %380 = vmatpush.msra.mxu0 0.0
        %381 = vmatpush.msra.mxu0 0.0
        %382 = vmatpush.msra.mxu0 0.0
        %383 = vmatpush.msra.mxu0 0.0
        %384 = vmatpush.msra.mxu0 0.0
        %385 = vmatpush.msra.mxu0 0.0
        %386 = vmatpush.msra.mxu0 0.0
        %387 = vmatpush.msra.mxu0 0.0
        %388 = vmatpush.msra.mxu0 0.0
        %389 = vmatpush.msra.mxu0 0.0
        %390 = vmatpush.msra.mxu0 0.0
        %391 = vmatpush.msra.mxu0 0.0
        %392 = vmatpush.msra.mxu0 0.0
        %393 = vmatpush.msra.mxu0 %v373
        %394 = vmatmul.f32.gmra.mxu0 %v376
        %v395 = vpop.f32.mrf.mxu0
        %v396 = vadd.f32 0.0, %v395
        %397 = vdwg.mxu0
        %v398 = vadd.f32 %v361, %v396
        %400 = vrot.lane.b32.xlu0 %v307, 8
        %v401 = vpop.permute.xlu0 %400
        %v403 = vmul.f32 %v306, %v401
        %s404 = scalar_lea.vmem %s3, 24
        %v405 = vld [vmem:[%s404] sm:$0xff]
        %407 = vrot.lane.b32.xlu0 %v403, 120
        %v408 = vpop.permute.xlu0 %407
        %v411 = vsel %vm316, %v405, 0
        %413 = vmatpush.msra.mxu0 0.0
        %414 = vmatpush.msra.mxu0 0.0
        %415 = vmatpush.msra.mxu0 0.0
        %416 = vmatpush.msra.mxu0 0.0
        %417 = vmatpush.msra.mxu0 0.0
        %418 = vmatpush.msra.mxu0 0.0
        %419 = vmatpush.msra.mxu0 0.0
        %420 = vmatpush.msra.mxu0 0.0
        %421 = vmatpush.msra.mxu0 0.0
        %422 = vmatpush.msra.mxu0 0.0
        %423 = vmatpush.msra.mxu0 0.0
        %424 = vmatpush.msra.mxu0 0.0
        %425 = vmatpush.msra.mxu0 0.0
        %426 = vmatpush.msra.mxu0 0.0
        %427 = vmatpush.msra.mxu0 0.0
        %428 = vmatpush.msra.mxu0 %v408
        %429 = vmatmul.f32.gmra.mxu0 %v411
        %v430 = vpop.f32.mrf.mxu0
        %v431 = vadd.f32 0.0, %v430
        %432 = vdwg.mxu0
        %v433 = vadd.f32 %v398, %v431
        %s434 = scalar_lea.vmem %s3, 32
        %v435 = vld [vmem:[%s434] sm:$0xff]
        %436 = vrot.lane.b32.xlu0 %v306, 119
        %v437 = vpop.permute.xlu0 %436
        %v440 = vsel %vm316, %v435, 0
        %442 = vmatpush.msra.mxu0 0.0
        %443 = vmatpush.msra.mxu0 0.0
        %444 = vmatpush.msra.mxu0 0.0
        %445 = vmatpush.msra.mxu0 0.0
        %446 = vmatpush.msra.mxu0 0.0
        %447 = vmatpush.msra.mxu0 0.0
        %448 = vmatpush.msra.mxu0 0.0
        %449 = vmatpush.msra.mxu0 0.0
        %450 = vmatpush.msra.mxu0 0.0
        %451 = vmatpush.msra.mxu0 0.0
        %452 = vmatpush.msra.mxu0 0.0
        %453 = vmatpush.msra.mxu0 0.0
        %454 = vmatpush.msra.mxu0 0.0
        %455 = vmatpush.msra.mxu0 0.0
        %456 = vmatpush.msra.mxu0 0.0
        %457 = vmatpush.msra.mxu0 %v437
        %458 = vmatmul.f32.gmra.mxu0 %v440
        %v459 = vpop.f32.mrf.mxu0
        %v460 = vadd.f32 0.0, %v459
        %461 = vdwg.mxu0
        %v462 = vadd.f32 %v433, %v460
        %463 = vrot.lane.b32.xlu0 %v363, 10
        %v464 = vpop.permute.xlu0 %463
        %v466 = vmul.f32 %v306, %v464
        %s467 = scalar_lea.vmem %s3, 40
        %v468 = vld [vmem:[%s467] sm:$0xff]
        %470 = vrot.lane.b32.xlu0 %v466, 118
        %v471 = vpop.permute.xlu0 %470
        %v474 = vsel %vm316, %v468, 0
        %476 = vmatpush.msra.mxu0 0.0
        %477 = vmatpush.msra.mxu0 0.0
        %478 = vmatpush.msra.mxu0 0.0
        %479 = vmatpush.msra.mxu0 0.0
        %480 = vmatpush.msra.mxu0 0.0
        %481 = vmatpush.msra.mxu0 0.0
        %482 = vmatpush.msra.mxu0 0.0
        %483 = vmatpush.msra.mxu0 0.0
        %484 = vmatpush.msra.mxu0 0.0
        %485 = vmatpush.msra.mxu0 0.0
        %486 = vmatpush.msra.mxu0 0.0
        %487 = vmatpush.msra.mxu0 0.0
        %488 = vmatpush.msra.mxu0 0.0
        %489 = vmatpush.msra.mxu0 0.0
        %490 = vmatpush.msra.mxu0 0.0
        %491 = vmatpush.msra.mxu0 %v471
        %492 = vmatmul.f32.gmra.mxu0 %v474
        %v493 = vpop.f32.mrf.mxu0
        %v494 = vadd.f32 0.0, %v493
        %495 = vdwg.mxu0
        %v496 = vadd.f32 %v462, %v494
        %497 = vrot.lane.b32.xlu0 %v307, 16
        %v498 = vpop.permute.xlu0 %497
        %v500 = vmul.f32 %v306, %v498
        %s501 = scalar_lea.vmem %s3, 48
        %v502 = vld [vmem:[%s501] sm:$0xff]
        %504 = vrot.lane.b32.xlu0 %v500, 112
        %v505 = vpop.permute.xlu0 %504
        %v508 = vsel %vm316, %v502, 0
        %510 = vmatpush.msra.mxu0 0.0
        %511 = vmatpush.msra.mxu0 0.0
        %512 = vmatpush.msra.mxu0 0.0
        %513 = vmatpush.msra.mxu0 0.0
        %514 = vmatpush.msra.mxu0 0.0
        %515 = vmatpush.msra.mxu0 0.0
        %516 = vmatpush.msra.mxu0 0.0
        %517 = vmatpush.msra.mxu0 0.0
        %518 = vmatpush.msra.mxu0 0.0
        %519 = vmatpush.msra.mxu0 0.0
        %520 = vmatpush.msra.mxu0 0.0
        %521 = vmatpush.msra.mxu0 0.0
        %522 = vmatpush.msra.mxu0 0.0
        %523 = vmatpush.msra.mxu0 0.0
        %524 = vmatpush.msra.mxu0 0.0
        %525 = vmatpush.msra.mxu0 %v505
        %526 = vmatmul.f32.gmra.mxu0 %v508
        %v527 = vpop.f32.mrf.mxu0
        %v528 = vadd.f32 0.0, %v527
        %529 = vdwg.mxu0
        %v530 = vadd.f32 %v496, %v528
        %s531 = scalar_lea.vmem %s3, 56
        %v532 = vld [vmem:[%s531] sm:$0xff]
        %533 = vrot.lane.b32.xlu0 %v306, 111
        %v534 = vpop.permute.xlu0 %533
        %v537 = vsel %vm316, %v532, 0
        %539 = vmatpush.msra.mxu0 0.0
        %540 = vmatpush.msra.mxu0 0.0
        %541 = vmatpush.msra.mxu0 0.0
        %542 = vmatpush.msra.mxu0 0.0
        %543 = vmatpush.msra.mxu0 0.0
        %544 = vmatpush.msra.mxu0 0.0
        %545 = vmatpush.msra.mxu0 0.0
        %546 = vmatpush.msra.mxu0 0.0
        %547 = vmatpush.msra.mxu0 0.0
        %548 = vmatpush.msra.mxu0 0.0
        %549 = vmatpush.msra.mxu0 0.0
        %550 = vmatpush.msra.mxu0 0.0
        %551 = vmatpush.msra.mxu0 0.0
        %552 = vmatpush.msra.mxu0 0.0
        %553 = vmatpush.msra.mxu0 0.0
        %554 = vmatpush.msra.mxu0 %v534
        %555 = vmatmul.f32.gmra.mxu0 %v537
        %v556 = vpop.f32.mrf.mxu0
        %v557 = vadd.f32 0.0, %v556
        %558 = vdwg.mxu0
        %v559 = vadd.f32 %v530, %v557
        %560 = vrot.lane.b32.xlu0 %v363, 18
        %v561 = vpop.permute.xlu0 %560
        %v563 = vmul.f32 %v306, %v561
        %s564 = scalar_lea.vmem %s3, 64
        %v565 = vld [vmem:[%s564] sm:$0xff]
        %567 = vrot.lane.b32.xlu0 %v563, 110
        %v568 = vpop.permute.xlu0 %567
        %v571 = vsel %vm316, %v565, 0
        %573 = vmatpush.msra.mxu0 0.0
        %574 = vmatpush.msra.mxu0 0.0
        %575 = vmatpush.msra.mxu0 0.0
        %576 = vmatpush.msra.mxu0 0.0
        %577 = vmatpush.msra.mxu0 0.0
        %578 = vmatpush.msra.mxu0 0.0
        %579 = vmatpush.msra.mxu0 0.0
        %580 = vmatpush.msra.mxu0 0.0
        %581 = vmatpush.msra.mxu0 0.0
        %582 = vmatpush.msra.mxu0 0.0
        %583 = vmatpush.msra.mxu0 0.0
        %584 = vmatpush.msra.mxu0 0.0
        %585 = vmatpush.msra.mxu0 0.0
        %586 = vmatpush.msra.mxu0 0.0
        %587 = vmatpush.msra.mxu0 0.0
        %588 = vmatpush.msra.mxu0 %v568
        %589 = vmatmul.f32.gmra.mxu0 %v571
        %v590 = vpop.f32.mrf.mxu0
        %v591 = vadd.f32 0.0, %v590
        %592 = vdwg.mxu0
        %v593 = vadd.f32 %v559, %v591
        %v594 = vmul.f32 %v269, %v307
        %v595 = vmul.f32 %v270, %v307
        %v596 = vld [vmem:[%s4] sm:$0xff]
        %s597 = scalar_lea.vmem %s4, 8
        %v598 = vld [vmem:[%s597] sm:$0xff]
        %601 = vrot.lane.b32.xlu0 %v269, 127
        %v602 = vpop.permute.xlu0 %601
        %603 = vrot.lane.b32.xlu0 %v270, 127
        %v604 = vpop.permute.xlu0 %603
        %v608 = vsel %vm281, %v598, 0
        %610 = vmatpush.msra.mxu0 0.0
        %611 = vmatpush.msra.mxu0 0.0
        %612 = vmatpush.msra.mxu0 0.0
        %613 = vmatpush.msra.mxu0 0.0
        %614 = vmatpush.msra.mxu0 0.0
        %615 = vmatpush.msra.mxu0 0.0
        %616 = vmatpush.msra.mxu0 0.0
        %617 = vmatpush.msra.mxu0 0.0
        %618 = vmatpush.msra.mxu0 0.0
        %619 = vmatpush.msra.mxu0 0.0
        %620 = vmatpush.msra.mxu0 0.0
        %621 = vmatpush.msra.mxu0 0.0
        %622 = vmatpush.msra.mxu0 0.0
        %623 = vmatpush.msra.mxu0 0.0
        %624 = vmatpush.msra.mxu0 %v604
        %625 = vmatpush.msra.mxu0 %v602
        %626 = vmatmul.f32.gmra.mxu0 %v608
        %v627 = vpop.f32.mrf.mxu0
        %v628 = vadd.f32 0.0, %v627
        %629 = vdwg.mxu0
        %v631 = vsel %vm281, %v596, 0
        %633 = vmatpush.msra.mxu0 0.0
        %634 = vmatpush.msra.mxu0 0.0
        %635 = vmatpush.msra.mxu0 0.0
        %636 = vmatpush.msra.mxu0 0.0
        %637 = vmatpush.msra.mxu0 0.0
        %638 = vmatpush.msra.mxu0 0.0
        %639 = vmatpush.msra.mxu0 0.0
        %640 = vmatpush.msra.mxu0 0.0
        %641 = vmatpush.msra.mxu0 0.0
        %642 = vmatpush.msra.mxu0 0.0
        %643 = vmatpush.msra.mxu0 0.0
        %644 = vmatpush.msra.mxu0 0.0
        %645 = vmatpush.msra.mxu0 0.0
        %646 = vmatpush.msra.mxu0 0.0
        %647 = vmatpush.msra.mxu0 %v595
        %648 = vmatpush.msra.mxu0 %v594
        %649 = vmatmul.f32.gmra.mxu0 %v631
        %v650 = vpop.f32.mrf.mxu0
        %v651 = vadd.f32 %v628, %v650
        %652 = vdwg.mxu0
        %v653 = vmul.f32 %v269, %v401
        %v654 = vmul.f32 %v270, %v401
        %s655 = scalar_lea.vmem %s4, 16
        %v656 = vld [vmem:[%s655] sm:$0xff]
        %659 = vrot.lane.b32.xlu0 %v653, 120
        %v660 = vpop.permute.xlu0 %659
        %661 = vrot.lane.b32.xlu0 %v654, 120
        %v662 = vpop.permute.xlu0 %661
        %v666 = vsel %vm281, %v656, 0
        %668 = vmatpush.msra.mxu0 0.0
        %669 = vmatpush.msra.mxu0 0.0
        %670 = vmatpush.msra.mxu0 0.0
        %671 = vmatpush.msra.mxu0 0.0
        %672 = vmatpush.msra.mxu0 0.0
        %673 = vmatpush.msra.mxu0 0.0
        %674 = vmatpush.msra.mxu0 0.0
        %675 = vmatpush.msra.mxu0 0.0
        %676 = vmatpush.msra.mxu0 0.0
        %677 = vmatpush.msra.mxu0 0.0
        %678 = vmatpush.msra.mxu0 0.0
        %679 = vmatpush.msra.mxu0 0.0
        %680 = vmatpush.msra.mxu0 0.0
        %681 = vmatpush.msra.mxu0 0.0
        %682 = vmatpush.msra.mxu0 %v662
        %683 = vmatpush.msra.mxu0 %v660
        %684 = vmatmul.f32.gmra.mxu0 %v666
        %v685 = vpop.f32.mrf.mxu0
        %v686 = vadd.f32 0.0, %v685
        %687 = vdwg.mxu0
        %v688 = vadd.f32 %v651, %v686
        %s689 = scalar_lea.vmem %s4, 24
        %v690 = vld [vmem:[%s689] sm:$0xff]
        %691 = vrot.lane.b32.xlu0 %v269, 119
        %v692 = vpop.permute.xlu0 %691
        %693 = vrot.lane.b32.xlu0 %v270, 119
        %v694 = vpop.permute.xlu0 %693
        %v698 = vsel %vm281, %v690, 0
        %700 = vmatpush.msra.mxu0 0.0
        %701 = vmatpush.msra.mxu0 0.0
        %702 = vmatpush.msra.mxu0 0.0
        %703 = vmatpush.msra.mxu0 0.0
        %704 = vmatpush.msra.mxu0 0.0
        %705 = vmatpush.msra.mxu0 0.0
        %706 = vmatpush.msra.mxu0 0.0
        %707 = vmatpush.msra.mxu0 0.0
        %708 = vmatpush.msra.mxu0 0.0
        %709 = vmatpush.msra.mxu0 0.0
        %710 = vmatpush.msra.mxu0 0.0
        %711 = vmatpush.msra.mxu0 0.0
        %712 = vmatpush.msra.mxu0 0.0
        %713 = vmatpush.msra.mxu0 0.0
        %714 = vmatpush.msra.mxu0 %v694
        %715 = vmatpush.msra.mxu0 %v692
        %716 = vmatmul.f32.gmra.mxu0 %v698
        %v717 = vpop.f32.mrf.mxu0
        %v718 = vadd.f32 0.0, %v717
        %719 = vdwg.mxu0
        %v720 = vadd.f32 %v688, %v718
        %722 = vset.pattern.permute.xlu0 0
        %723 = vperm.xlu0 %722, %v305
        %v724 = vpop.permute.xlu0 %723
        %v726 = vmul.f32 %v593, %v724
        %v727 = vadd.f32 %v720, %v726
        %v728 = vmax.f32 %v727, 0.0
        %vm729 = vcmask 523264
        %730 = vst.msk [vmem:[%s257] sm:$0xff] %vm729, %v728
        %s731 = sand.u32 %s164, 1
        %s732 = scalar_lea.sflag [#allocation3], %s731
        %s733 = sand.u32 %s164, 1
        %s734 = smul.addr %s733, 8
        %s735 = scalar_lea.vmem [#allocation2], %s734
        // Predicated region
        $region45: #{tpu_custom_call.1} parent=43 // pred_check
          %p736 = pneg %p174
        $region46: #{tpu_custom_call.1} parent=43 // pred_check_branch
          %738 = sbr.rel (%p736) target = $region48
        $region47: #{tpu_custom_call.1} parent=43 // pred_region
          %740 = vsyncadd %s732, 0
          %s741 = smul.addr %s20, 8
          %s742 = scalar_lea.hbm %s6, %s741
          %s744 = sshll.u32 %s735, 4
          %s745 = int_to_ptr.vmem [resolvable:$true] %s744
          %s746 = sshll.u32 %s742, 4
          %s747 = int_to_ptr.hbm [resolvable:$true] %s746
          %749 = dma.vmem_to_hbm [thread:$0]  %s745, 128, %s747, %s732
        $region48: #{tpu_custom_call.1} parent=43 // pred_fallthru
          _
      $region44: #{tpu_custom_call.1} parent=5 // pred_fallthru
        _
      %p750 = scmp.le.s32.totalorder 2, %s15
      // Predicated region
      $region49: #{tpu_custom_call.1} parent=5 // pred_check
        %p751 = pneg %p750
      $region50: #{tpu_custom_call.1} parent=5 // pred_check_branch
        %753 = sbr.rel (%p751) target = $region52
      $region51: #{tpu_custom_call.1} parent=5 // pred_region
        %s754 = ssub.s32 %s15, 2
        // Predicated region
        $region53: #{tpu_custom_call.1} parent=51 // pred_check
          %p755 = pneg %p180
        $region54: #{tpu_custom_call.1} parent=51 // pred_check_branch
          %757 = sbr.rel (%p755) target = $region56
        $region55: #{tpu_custom_call.1} parent=51 // pred_region
          %s758 = sand.u32 %s165, 1
          %s759 = scalar_lea.sflag [#allocation3], %s758
          %s760 = sand.u32 %s165, 1
          %s761 = smul.addr %s760, 8
          %s762 = scalar_lea.vmem [#allocation2], %s761
          %764 = dma.done %s759, 128
        $region56: #{tpu_custom_call.1} parent=51 // pred_fallthru
          _
      $region52: #{tpu_custom_call.1} parent=5 // pred_fallthru
        _
    $region6: #{tpu_custom_call.1} parent=1 // loop_footer
      %s19 = sadd.s32 1, %s15
    $region7: #{tpu_custom_call.1} parent=1 // loop_footer_branch
      %14 = sbr.rel target = $region3
    $region8: #{tpu_custom_call.1} parent=1 // loop_exit
      _
    %765 = vsyncpa [#allocation3], 1
    %s766 = scalar_lea.sflag [#allocation3], 1
    %767 = vsyncpa %s766, 1

</llo_original>
